<compile_context>
chip_gen: v7x
topology: tpu7x:2x2x1
jax: 0.10.0
libtpu: 0.0.40
codegen_flags: <defaults>
</compile_context>

<pallas_src>
import math

import jax
import jax.numpy as jnp
from jax.experimental import pallas as pl
from jax.experimental.pallas import tpu as pltpu


def _cdiv(a, b):
    return -(-a // b)


def _pe_kernel(a_ref, b_ref, o_ref):
    """One (tile_rows, W) slab tile.

    angle[g, l] = g * a_row[l] + b_row[l]
    where a_row = P * inv_freq(col(l)) and b_row = off(l)*inv_freq + phase(l),
    so angle = (g*P + off) * inv_freq + (col%2)*pi/2 and out = sin(angle)
    (sin for even cols, cos for odd cols via the pi/2 phase shift).
    """
    tm, w = o_ref.shape
    i = pl.program_id(0)
    row = (jax.lax.broadcasted_iota(jnp.int32, (tm, w), 0) + i * tm).astype(jnp.float32)
    o_ref[...] = jnp.sin(row * a_ref[...] + b_ref[...])


def _choose_rows(rows_needed, bytes_per_row, tile_budget=4 << 20):
    """Pick (tile_rows, total_rows, num_tiles) for the slab grid.

    Tiles are capped at ~4 MiB (x2 double-buffered = 8 MiB, safe under the
    scoped-VMEM defaults on v5e/v6e/v7x). Big tables get >=2 grid steps so the
    v7x megacore can shard them; tiny tables use one full-array block.
    """
    if rows_needed < 16 and rows_needed * bytes_per_row <= tile_budget:
        # Single block equal to the full array -> exempt from the 8-row rule.
        return rows_needed, rows_needed, 1
    max_rows = max(8, (tile_budget // bytes_per_row) // 8 * 8)
    half = max(8, _cdiv(_cdiv(rows_needed, 2), 8) * 8)
    tile = min(max_rows, half)
    num = _cdiv(rows_needed, tile)
    return tile, tile * num, num


def build_position_table(d_model, max_len=512):
    """Builds the full (max_len, d_model) sinusoidal table with one Pallas call."""
    # Pack P positions per 128-lane output row when d_model < 128 (lane-dense stores).
    if d_model < 128 and 128 % d_model == 0:
        pack = 128 // d_model
    else:
        pack = 1
    w = pack * d_model
    rows_needed = _cdiv(max_len, pack)
    tile, total_rows, num = _choose_rows(rows_needed, w * 4)

    # Column-only precompute (tiny, done once outside the kernel).
    lane = jnp.arange(w, dtype=jnp.int32)
    col = lane % d_model
    off = (lane // d_model).astype(jnp.float32)            # position offset within a packed row
    two_k = ((col // 2) * 2).astype(jnp.float32)            # 2k for both 2k and 2k+1
    inv_freq = jnp.exp((-math.log(10000.0) / d_model) * two_k)
    phase = (col % 2).astype(jnp.float32) * (math.pi / 2.0)  # cos(x) = sin(x + pi/2)
    a_row = (float(pack) * inv_freq)[None, :]                # (1, W)
    b_row = (off * inv_freq + phase)[None, :]                # (1, W)

    slab = pl.pallas_call(
        _pe_kernel,
        out_shape=jax.ShapeDtypeStruct((total_rows, w), jnp.float32),
        grid=(num,),
        in_specs=[pl.BlockSpec((1, w), lambda i: (0, 0)),
                  pl.BlockSpec((1, w), lambda i: (0, 0))],
        out_specs=pl.BlockSpec((tile, w), lambda i: (i, 0)),
        compiler_params=pltpu.CompilerParams(dimension_semantics=("parallel",)),
    )(a_row, b_row)

    # Row-major contiguous reshape (free bitcast) back to (positions, d_model).
    pe = slab.reshape(total_rows * pack, d_model)
    if total_rows * pack != max_len:
        pe = pe[:max_len, :]
    return pe


class PositionEmbedding:
    """JAX/Pallas counterpart of the PyTorch module (table cached at init)."""

    def __init__(self, d_model, max_len=512):
        self.d_model = d_model
        self.max_len = max_len
        self.pe = jax.block_until_ready(build_position_table(d_model, max_len))

    def __call__(self, x):
        length = x.shape[0]
        assert length <= self.max_len, "sequence longer than max_len"
        return self.pe[:length, :]


def _reference_pe(length, d_model):
    """Pure-JAX reference mirroring the PyTorch __init__ construction."""
    pos = jnp.arange(length, dtype=jnp.float32)[:, None]
    term = jnp.exp(-math.log(10000.0) / d_model
                   * jnp.arange(0, d_model, 2, dtype=jnp.float32))
    pe = jnp.zeros((length, d_model), jnp.float32)
    pe = pe.at[:, 0::2].set(jnp.sin(term * pos))
    pe = pe.at[:, 1::2].set(jnp.cos(term * pos))
    return pe


if __name__ == "__main__":
    d_model = 32
    seq_len = 8
    max_len = 512

    key = jax.random.PRNGKey(0)
    # x only contributes its leading (sequence) dimension to the forward pass.
    x = jax.random.normal(key, (seq_len, d_model), dtype=jnp.float32)

    module = PositionEmbedding(d_model, max_len=max_len)
    out = jax.block_until_ready(module(x))

    ref_full = _reference_pe(max_len, d_model)
    assert out.shape == (seq_len, d_model)
    assert out.dtype == jnp.float32
    # Forward slice (small angles -> essentially exact).
    assert jnp.allclose(out, ref_full[:seq_len], atol=1e-5, rtol=1e-5)
    # Full cached table (phase-shift trick differs by ~1 ulp of the angle).
    assert jnp.allclose(module.pe, ref_full, atol=2e-4, rtol=1e-5)
    print("KERNEL_OK")
</pallas_src>

<mosaic_0001>
module attributes {stable_mosaic.version = 11 : i64} {
  func.func @_pe_kernel(%arg0: i32, %arg1: memref<1x128xf32, #tpu.memory_space<vmem>>, %arg2: memref<1x128xf32, #tpu.memory_space<vmem>>, %arg3: memref<64x128xf32, #tpu.memory_space<vmem>>) attributes {dimension_semantics = [#tpu.dimension_semantics<parallel>], iteration_bounds = array<i64: 2>, scalar_prefetch = 0 : i64, scratch_operands = 0 : i64, tpu.core_type = #tpu.core_type<tc>, window_params = [{pipeline_mode = #tpu.pipeline_mode<synchronous>, transform_indices = @transform_0, window_bounds = array<i64: 1, 128>}, {pipeline_mode = #tpu.pipeline_mode<synchronous>, transform_indices = @transform_1, window_bounds = array<i64: 1, 128>}, {transform_indices = @transform_2, window_bounds = array<i64: 64, 128>}]} {
    %0 = tpu.iota {dimensions = array<i32: 0>} : vector<64x128xi32>
    %c64_i32 = arith.constant 64 : i32
    %1 = arith.muli %arg0, %c64_i32 : i32
    %2 = vector.broadcast %1 : i32 to vector<64x128xi32>
    %3 = arith.addi %0, %2 : vector<64x128xi32>
    %4 = arith.sitofp %3 : vector<64x128xi32> to vector<64x128xf32>
    %c0 = arith.constant 0 : index
    %c0_0 = arith.constant 0 : index
    %5 = vector.load %arg1[%c0, %c0_0] : memref<1x128xf32, #tpu.memory_space<vmem>>, vector<1x128xf32>
    %6 = vector.broadcast %5 : vector<1x128xf32> to vector<64x128xf32>
    %7 = arith.mulf %4, %6 : vector<64x128xf32>
    %c0_1 = arith.constant 0 : index
    %c0_2 = arith.constant 0 : index
    %8 = vector.load %arg2[%c0_1, %c0_2] : memref<1x128xf32, #tpu.memory_space<vmem>>, vector<1x128xf32>
    %9 = vector.broadcast %8 : vector<1x128xf32> to vector<64x128xf32>
    %10 = arith.addf %7, %9 : vector<64x128xf32>
    %11 = math.sin %10 : vector<64x128xf32>
    %c0_3 = arith.constant 0 : index
    %c0_4 = arith.constant 0 : index
    %12 = vector.load %arg3[%c0_3, %c0_4] : memref<64x128xf32, #tpu.memory_space<vmem>>, vector<64x128xf32>
    tpu.vector_store %arg3[%c0_3, %c0_4], %11 {strides = array<i32>} : memref<64x128xf32, #tpu.memory_space<vmem>>, vector<64x128xf32>,
    return
  }
  func.func @transform_0(%arg0: i32) -> (i32, i32) {
    %c0_i32 = arith.constant 0 : i32
    %c0_i32_0 = arith.constant 0 : i32
    %c0_i32_1 = arith.constant 0 : i32
    return %c0_i32, %c0_i32_0 : i32, i32
  }
  func.func @transform_1(%arg0: i32) -> (i32, i32) {
    %c0_i32 = arith.constant 0 : i32
    %c0_i32_0 = arith.constant 0 : i32
    %c0_i32_1 = arith.constant 0 : i32
    return %c0_i32, %c0_i32_0 : i32, i32
  }
  func.func @transform_2(%arg0: i32) -> (i32, i32) {
    %c0_i32 = arith.constant 0 : i32
    %c0_i32_0 = arith.constant 0 : i32
    return %arg0, %c0_i32 : i32, i32
  }
}

</mosaic_0001>

<llo_original>
// kernel: tpu_custom_call.1
$region0: #{tpu_custom_call.1}
  #allocation0 [shape = 'u32[]', space=smem, size = 0x4, offset = 0x4, fixed_abs, tag = 'smem constant byte address 0x4 - core index']
  #allocation1 [shape = 'u32[144,128]{1,0:T(1,128)}', space=vmem, size = 0x12000, scoped, tag = 'internal scratch']
  %s0 = inlined_call_operand.hbm [shape: f32[1,128], index: 0, kind: input, shape index: {}]
  %s1 = inlined_call_operand.vmem [shape: f32[1,128], index: 1, kind: input, shape index: {}]
  %s2 = inlined_call_operand.hbm [shape: f32[128,128], index: 2, kind: output, shape index: {}]
  %s3 = sld [smem:[#allocation0]]
  $region45: #{tpu_custom_call.1} parent=0
    _
  %s5 = ssub.s32 1, %s3
  %s6 = scalar_select 0, %s5, %s3
  $region1: #{tpu_custom_call.1} parent=0
    #allocation2 [shape = 'u8[512]{0}', space=vmem, size = 0x400, scoped, tag = 'input window, operand 0, single buffered']
    #allocation3 [shape = 's32[2]{0}', space=sflag, size = 0x8, scoped, tag = 'scoped memory for tpu_custom_call.1']
    #allocation4 [shape = 's32[2]{0}', space=sflag, size = 0x8, scoped, tag = 'scoped memory for tpu_custom_call.1']
    #allocation5 [shape = 'u8[65536]{0}', space=vmem, size = 0x10000, scoped, tag = 'output window, operand 0']
    %7 = vsyncpa [#allocation3], 0
    %8 = vsyncpa [#allocation4], 0
    %s9 = scalar_lea.sflag [#allocation4], 1
    %10 = vsyncpa %s9, 0
    loop: start=0, step=1, limit=4
    $region2: #{tpu_custom_call.1} parent=1 // loop_pre_header
      _
    $region3: #{tpu_custom_call.1} parent=1 // loop_header
      %s12 = sphi 0, %s16
      %p13 = scmp.ge.s32.totalorder %s12, 4
      %s20 = sphi 0, %s20
      %s22 = sphi 0, %s20
      %s23 = sphi 0, %s22
      %s37 = sphi 0, %s23
      %s41 = sphi 0, %s41
      %s43 = sphi 0, %s41
      %s44 = sphi 0, %s43
      %s58 = sphi 0, %s44
      %s64 = sphi 0, %s66
      %s67 = sphi 0, %s64
      %s68 = sphi 0, %s67
      %s84 = sphi 0, %s68
    $region4: #{tpu_custom_call.1} parent=1 // loop_header_branch
      %15 = sbr.rel (%p13) target = $region8
    $region5: #{tpu_custom_call.1} parent=1 // loop_body
      %s17 = ssub.s32 %s12, 1
      %s18 = ssub.s32 %s12, 2
      %s19 = sadd.s32 %s12, 1
      %s21 = sadd.s32 %s20, 1
      %p24 = scmp.eq.s32.totalorder %s12, 1
      %p25 = scmp.ne.s32.totalorder %s20, %s22
      %p26 = scmp.eq.s32.totalorder %s12, 0
      %p27 = por %p25, %p26
      %p28 = scmp.ne.s32.totalorder %s20, %s22
      %p29 = scmp.eq.s32.totalorder %s17, 1
      %p30 = por %p28, %p29
      %p31 = scmp.ne.s32.totalorder %s22, %s23
      %p32 = scmp.eq.s32.totalorder %s17, 0
      %p33 = por %p31, %p32
      %p34 = scmp.ne.s32.totalorder %s22, %s23
      %p35 = scmp.eq.s32.totalorder %s18, 1
      %p36 = por %p34, %p35
      %p38 = scmp.ne.s32.totalorder %s23, %s37
      %p39 = scmp.eq.s32.totalorder %s18, 0
      %p40 = por %p38, %p39
      %s42 = sadd.s32 %s41, 1
      %p45 = scmp.eq.s32.totalorder %s12, 1
      %p46 = scmp.ne.s32.totalorder %s41, %s43
      %p47 = scmp.eq.s32.totalorder %s12, 0
      %p48 = por %p46, %p47
      %p49 = scmp.ne.s32.totalorder %s41, %s43
      %p50 = scmp.eq.s32.totalorder %s17, 1
      %p51 = por %p49, %p50
      %p52 = scmp.ne.s32.totalorder %s43, %s44
      %p53 = scmp.eq.s32.totalorder %s17, 0
      %p54 = por %p52, %p53
      %p55 = scmp.ne.s32.totalorder %s43, %s44
      %p56 = scmp.eq.s32.totalorder %s18, 1
      %p57 = por %p55, %p56
      %p59 = scmp.ne.s32.totalorder %s44, %s58
      %p60 = scmp.eq.s32.totalorder %s18, 0
      %p61 = por %p59, %p60
      %s62 = ssub.s32 %s12, %s19
      %p63 = scmp.eq.s32.totalorder %s62, 0
      %s65 = sadd.s32 %s64, 1
      %s66 = scalar_select %p63, %s64, %s65
      %p69 = pneg %p63
      %p70 = scmp.eq.s32.totalorder %s12, 1
      %p71 = por %p69, %p70
      %p72 = scmp.ne.s32.totalorder %s64, %s67
      %p73 = scmp.eq.s32.totalorder %s12, 0
      %p74 = por %p72, %p73
      %p75 = scmp.ne.s32.totalorder %s64, %s67
      %p76 = scmp.eq.s32.totalorder %s17, 1
      %p77 = por %p75, %p76
      %p78 = scmp.ne.s32.totalorder %s67, %s68
      %p79 = scmp.eq.s32.totalorder %s17, 0
      %p80 = por %p78, %p79
      %p81 = scmp.ne.s32.totalorder %s67, %s68
      %p82 = scmp.eq.s32.totalorder %s18, 1
      %p83 = por %p81, %p82
      %p85 = scmp.ne.s32.totalorder %s68, %s84
      %p86 = scmp.eq.s32.totalorder %s18, 0
      %p87 = por %p85, %p86
      %p88 = scmp.le.s32.totalorder 1, %s12
      %p89 = scmp.lt.s32.totalorder %s12, 3
      %p90 = pnand %p88, %p89
      %p91 = pneg %p90
      // Predicated region
      $region9: #{tpu_custom_call.1} parent=5 // pred_check
        _
      $region10: #{tpu_custom_call.1} parent=5 // pred_check_branch
        %93 = sbr.rel (%p90) target = $region12
      $region11: #{tpu_custom_call.1} parent=5 // pred_region
        %s94 = ssub.s32 %s12, 1
        // Predicated region
        $region13: #{tpu_custom_call.1} parent=11 // pred_check
          %p95 = pneg %p33
        $region14: #{tpu_custom_call.1} parent=11 // pred_check_branch
          %97 = sbr.rel (%p95) target = $region16
        $region15: #{tpu_custom_call.1} parent=11 // pred_region
          %s99 = ssub.s32 16, 16
          %100 = vsyncadd [#allocation3], %s99
          %s102 = sshll.u32 [#allocation2], 4
          %s103 = int_to_ptr.vmem [resolvable:$true] %s102
          %105 = dma.hbm_to_vmem [thread:$0]  %s0, 16, %s103, [#allocation3]
        $region16: #{tpu_custom_call.1} parent=11 // pred_fallthru
          _
        // Predicated region
        $region17: #{tpu_custom_call.1} parent=11 // pred_check
          %p106 = pneg %p54
        $region18: #{tpu_custom_call.1} parent=11 // pred_check_branch
          %108 = sbr.rel (%p106) target = $region20
        $region19: #{tpu_custom_call.1} parent=11 // pred_region
          _
        $region20: #{tpu_custom_call.1} parent=11 // pred_fallthru
          _
      $region12: #{tpu_custom_call.1} parent=5 // pred_fallthru
        _
      %p109 = scmp.lt.s32.totalorder %s12, 2
      // Predicated region
      $region21: #{tpu_custom_call.1} parent=5 // pred_check
        %p110 = pneg %p109
      $region22: #{tpu_custom_call.1} parent=5 // pred_check_branch
        %112 = sbr.rel (%p110) target = $region24
      $region23: #{tpu_custom_call.1} parent=5 // pred_region
        _
      $region24: #{tpu_custom_call.1} parent=5 // pred_fallthru
        _
      %p113 = scmp.le.s32.totalorder 1, %s12
      %p114 = scmp.lt.s32.totalorder %s12, 3
      %p115 = pnand %p113, %p114
      %p116 = pneg %p115
      // Predicated region
      $region25: #{tpu_custom_call.1} parent=5 // pred_check
        _
      $region26: #{tpu_custom_call.1} parent=5 // pred_check_branch
        %118 = sbr.rel (%p115) target = $region28
      $region27: #{tpu_custom_call.1} parent=5 // pred_region
        %s119 = ssub.s32 %s12, 1
        // Predicated region
        $region29: #{tpu_custom_call.1} parent=27 // pred_check
          %p120 = pneg %p33
        $region30: #{tpu_custom_call.1} parent=27 // pred_check_branch
          %122 = sbr.rel (%p120) target = $region32
        $region31: #{tpu_custom_call.1} parent=27 // pred_region
          %123 = dma.done [#allocation3], 16
        $region32: #{tpu_custom_call.1} parent=27 // pred_fallthru
          _
        %p124 = pneg %p33
        %p125 = pneg %p30
        %p126 = pneg %p54
        %p127 = pneg %p51
        %p128 = pneg %p80
        %p129 = pneg %p77
        %s130 = sand.u32 %s67, 1
        %s131 = scalar_lea.sflag [#allocation4], %s130
        %s132 = sand.u32 %s67, 1
        %s133 = smul.addr %s132, 64
        %s134 = scalar_lea.vmem [#allocation5], %s133
        %s135 = smul.u32 8, %s17
        %v136 = vlaneseq
        %v137 = vshrl.u32 %v136, 7
        %v138 = vadd.s32 %v137, 8
        %v139 = vadd.s32 %v137, 16
        %v140 = vadd.s32 %v137, 24
        %v141 = vadd.s32 %v137, 32
        %v142 = vadd.s32 %v137, 40
        %v143 = vadd.s32 %v137, 48
        %v144 = vadd.s32 %v137, 56
        %s145 = smul.u32 %s17, 64
        %v146 = vstv %s145
        %v147 = vadd.s32 %v137, %v146
        %v148 = vadd.s32 %v138, %v146
        %v149 = vadd.s32 %v139, %v146
        %v150 = vadd.s32 %v140, %v146
        %v151 = vadd.s32 %v141, %v146
        %v152 = vadd.s32 %v142, %v146
        %v153 = vadd.s32 %v143, %v146
        %v154 = vadd.s32 %v144, %v146
        %v155 = vcvt.s32.f32 %v147
        %v156 = vcvt.s32.f32 %v148
        %v157 = vcvt.s32.f32 %v149
        %v158 = vcvt.s32.f32 %v150
        %v159 = vcvt.s32.f32 %v151
        %v160 = vcvt.s32.f32 %v152
        %v161 = vcvt.s32.f32 %v153
        %v162 = vcvt.s32.f32 %v154
        %v163 = vld [vmem:[#allocation2] sm:$0x1]
        %v165 = vlaneseq
        %v166 = vshrl.u32 %v165, 7
        %v167 = vsub.s32 0, %v166
        %v168 = vrot.slane %v163, %v167
        %v170 = vmul.f32 %v155, %v168
        %v171 = vmul.f32 %v156, %v168
        %v172 = vmul.f32 %v157, %v168
        %v173 = vmul.f32 %v158, %v168
        %v174 = vmul.f32 %v159, %v168
        %v175 = vmul.f32 %v160, %v168
        %v176 = vmul.f32 %v161, %v168
        %v177 = vmul.f32 %v162, %v168
        %v178 = vld [vmem:[%s1] sm:$0x1]
        %v180 = vlaneseq
        %v181 = vshrl.u32 %v180, 7
        %v182 = vsub.s32 0, %v181
        %v183 = vrot.slane %v178, %v182
        %v185 = vadd.f32 %v170, %v183
        %v186 = vadd.f32 %v171, %v183
        %v187 = vadd.f32 %v172, %v183
        %v188 = vadd.f32 %v173, %v183
        %v189 = vadd.f32 %v174, %v183
        %v190 = vadd.f32 %v175, %v183
        %v191 = vadd.f32 %v176, %v183
        %v192 = vadd.f32 %v177, %v183
        %v193 = vand.u32 2147483647, %v185
        %vm194 = vcmp.le.f32.partialorder %v193, 0.7853982
        %vm195 = vcmp.lt.s32.totalorder %v185, 0
        %v196 = vand.u32 %v185, 2139095040
        %v197 = vshrl.u32 %v196, 23
        %v198 = vsub.s32 %v197, 127
        %v199 = vand.u32 2147483647, %v185
        %v200 = vand.u32 %v199, 8388607
        %v201 = vor.u32 %v200, 8388608
        %v202 = vsub.s32 0, %v201
        %v203 = vadd.s32 %v198, 1
        %vm204 = vcmp.gt.s32.totalorder %v203, 0
        %v205 = vsel %vm204, %v203, 0
        %v206 = vshrl.u32 %v205, 5
        %v207 = vand.u32 %v205, 31
        %v208 = vsub.s32 32, %v207
        %v209 = vshrl.u32 683565275, %v208
        %v210 = vshll.u32 683565275, %v207
        %v211 = vshrl.u32 2475754826, %v208
        %v212 = vor.u32 %v210, %v211
        %v213 = vshll.u32 2475754826, %v207
        %v214 = vshrl.u32 2131351028, %v208
        %v215 = vor.u32 %v213, %v214
        %v216 = vshll.u32 2131351028, %v207
        %v217 = vshrl.u32 2102212464, %v208
        %v218 = vor.u32 %v216, %v217
        %v219 = vshll.u32 2102212464, %v207
        %v220 = vshrl.u32 920167782, %v208
        %v221 = vor.u32 %v219, %v220
        %v222 = vshll.u32 920167782, %v207
        %v223 = vshrl.u32 1326507024, %v208
        %v224 = vor.u32 %v222, %v223
        %vm225 = vcmp.lt.s32.totalorder %v206, 1
        %vm226 = vcmp.lt.s32.totalorder %v206, 2
        %vm227 = vcmp.lt.s32.totalorder %v206, 3
        %vm228 = vcmp.lt.s32.totalorder %v206, 4
        %v229 = vsel %vm225, %v209, %v212
        %v230 = vsel %vm228, %v218, 2102212464
        %v231 = vsel %vm227, %v215, %v230
        %v232 = vsel %vm226, %v229, %v231
        %v233 = vsel %vm225, %v212, %v215
        %v234 = vsel %vm228, %v221, 920167782
        %v235 = vsel %vm227, %v218, %v234
        %v236 = vsel %vm226, %v233, %v235
        %v237 = vsel %vm225, %v215, %v218
        %v238 = vsel %vm228, %v224, 1326507024
        %v239 = vsel %vm227, %v221, %v238
        %v240 = vsel %vm226, %v237, %v239
        %v241 = vshll.u32 %v201, 8
        %v242 = vmul.u32.u64.compose %v241, %v240
        %v243 = vextract.low.u32 %v242
        %v244 = vextract.high.u32 %v242
        %v245 = vmul.u32.u64.compose %v241, %v236
        %v246 = vextract.low.u32 %v245
        %v247 = vextract.high.u32 %v245
        %v248 = vmul.u32 %v241, %v232
        %v249 = vadd.s32 %v244, %v246
        %vm250 = vc.u32 %v244, %v246
        %v251 = vadd.s32 %v247, 1
        %v252 = vsel %vm250, %v251, %v247
        %v253 = vadd.s32 %v248, %v252
        %v254 = vadd.s32 %v253, 536870912
        %v255 = vshrl.u32 %v254, 30
        %v256 = vshll.u32 %v255, 30
        %v257 = vsub.s32 %v253, %v256
        %vm258 = vcmp.lt.s32.totalorder %v257, 0
        %v259 = vsub.s32 0, %v257
        %v260 = vsel %vm258, %v259, %v257
        %v261 = vclz %v260
        %v262 = vsub.s32 %v261, 2
        %vm263 = vcmp.gt.s32.totalorder 0, %v262
        %v264 = vsel %vm263, 0, %v262
        %v265 = vsub.s32 32, %v264
        %v266 = vshll.u32 %v257, %v264
        %v267 = vshrl.u32 %v249, %v265
        %v268 = vor.u32 %v266, %v267
        %v269 = vsub.s32 4294967266, %v264
        %v270 = vadd.s32 %v269, 127
        %v271 = vshll.u32 %v270, 23
        %v272 = vor.u32 4788187, %v271
        %v273 = vand.u32 2147483647, %v272
        %v275 = vcvt.s32.f32 %v268
        %v276 = vmul.f32 %v275, %v273
        %v277 = vxor.u32 %v276, 2147483648
        %v278 = vsel %vm195, %v277, %v276
        %v279 = vsub.s32 4, %v255
        %v280 = vsel %vm195, %v279, %v255
        %v281 = vsel %vm194, %v185, %v278
        %v282 = vsel %vm194, 0, %v280
        %v283 = vcosq.f32.pop %v281
        %v284 = vsinq.f32.pop %v281
        %vm285 = vweird.f32 %v185
        %v286 = vadd.s32 %v282, 3
        %v287 = vand.u32 %v286, 3
        %vm288 = vcmp.lt.s32.totalorder %v287, 2
        %vm289 = vcmp.eq.s32.totalorder %v287, 0
        %v290 = vxor.u32 %v284, 2147483648
        %v291 = vsel %vm289, %v283, %v290
        %vm292 = vcmp.eq.s32.totalorder %v287, 2
        %v293 = vxor.u32 %v283, 2147483648
        %v294 = vsel %vm292, %v293, %v284
        %v295 = vsel %vm288, %v291, %v294
        %v296 = vsel %vm285, nan, %v295
        %v297 = vand.u32 2147483647, %v186
        %vm298 = vcmp.le.f32.partialorder %v297, 0.7853982
        %vm299 = vcmp.lt.s32.totalorder %v186, 0
        %v300 = vand.u32 %v186, 2139095040
        %v301 = vshrl.u32 %v300, 23
        %v302 = vsub.s32 %v301, 127
        %v303 = vand.u32 2147483647, %v186
        %v304 = vand.u32 %v303, 8388607
        %v305 = vor.u32 %v304, 8388608
        %v306 = vsub.s32 0, %v305
        %v307 = vadd.s32 %v302, 1
        %vm308 = vcmp.gt.s32.totalorder %v307, 0
        %v309 = vsel %vm308, %v307, 0
        %v310 = vshrl.u32 %v309, 5
        %v311 = vand.u32 %v309, 31
        %v312 = vsub.s32 32, %v311
        %v313 = vshrl.u32 683565275, %v312
        %v314 = vshll.u32 683565275, %v311
        %v315 = vshrl.u32 2475754826, %v312
        %v316 = vor.u32 %v314, %v315
        %v317 = vshll.u32 2475754826, %v311
        %v318 = vshrl.u32 2131351028, %v312
        %v319 = vor.u32 %v317, %v318
        %v320 = vshll.u32 2131351028, %v311
        %v321 = vshrl.u32 2102212464, %v312
        %v322 = vor.u32 %v320, %v321
        %v323 = vshll.u32 2102212464, %v311
        %v324 = vshrl.u32 920167782, %v312
        %v325 = vor.u32 %v323, %v324
        %v326 = vshll.u32 920167782, %v311
        %v327 = vshrl.u32 1326507024, %v312
        %v328 = vor.u32 %v326, %v327
        %vm329 = vcmp.lt.s32.totalorder %v310, 1
        %vm330 = vcmp.lt.s32.totalorder %v310, 2
        %vm331 = vcmp.lt.s32.totalorder %v310, 3
        %vm332 = vcmp.lt.s32.totalorder %v310, 4
        %v333 = vsel %vm329, %v313, %v316
        %v334 = vsel %vm332, %v322, 2102212464
        %v335 = vsel %vm331, %v319, %v334
        %v336 = vsel %vm330, %v333, %v335
        %v337 = vsel %vm329, %v316, %v319
        %v338 = vsel %vm332, %v325, 920167782
        %v339 = vsel %vm331, %v322, %v338
        %v340 = vsel %vm330, %v337, %v339
        %v341 = vsel %vm329, %v319, %v322
        %v342 = vsel %vm332, %v328, 1326507024
        %v343 = vsel %vm331, %v325, %v342
        %v344 = vsel %vm330, %v341, %v343
        %v345 = vshll.u32 %v305, 8
        %v346 = vmul.u32.u64.compose %v345, %v344
        %v347 = vextract.low.u32 %v346
        %v348 = vextract.high.u32 %v346
        %v349 = vmul.u32.u64.compose %v345, %v340
        %v350 = vextract.low.u32 %v349
        %v351 = vextract.high.u32 %v349
        %v352 = vmul.u32 %v345, %v336
        %v353 = vadd.s32 %v348, %v350
        %vm354 = vc.u32 %v348, %v350
        %v355 = vadd.s32 %v351, 1
        %v356 = vsel %vm354, %v355, %v351
        %v357 = vadd.s32 %v352, %v356
        %v358 = vadd.s32 %v357, 536870912
        %v359 = vshrl.u32 %v358, 30
        %v360 = vshll.u32 %v359, 30
        %v361 = vsub.s32 %v357, %v360
        %vm362 = vcmp.lt.s32.totalorder %v361, 0
        %v363 = vsub.s32 0, %v361
        %v364 = vsel %vm362, %v363, %v361
        %v365 = vclz %v364
        %v366 = vsub.s32 %v365, 2
        %vm367 = vcmp.gt.s32.totalorder 0, %v366
        %v368 = vsel %vm367, 0, %v366
        %v369 = vsub.s32 32, %v368
        %v370 = vshll.u32 %v361, %v368
        %v371 = vshrl.u32 %v353, %v369
        %v372 = vor.u32 %v370, %v371
        %v373 = vsub.s32 4294967266, %v368
        %v374 = vadd.s32 %v373, 127
        %v375 = vshll.u32 %v374, 23
        %v376 = vor.u32 4788187, %v375
        %v377 = vand.u32 2147483647, %v376
        %v379 = vcvt.s32.f32 %v372
        %v380 = vmul.f32 %v379, %v377
        %v381 = vxor.u32 %v380, 2147483648
        %v382 = vsel %vm299, %v381, %v380
        %v383 = vsub.s32 4, %v359
        %v384 = vsel %vm299, %v383, %v359
        %v385 = vsel %vm298, %v186, %v382
        %v386 = vsel %vm298, 0, %v384
        %v387 = vcosq.f32.pop %v385
        %v388 = vsinq.f32.pop %v385
        %vm389 = vweird.f32 %v186
        %v390 = vadd.s32 %v386, 3
        %v391 = vand.u32 %v390, 3
        %vm392 = vcmp.lt.s32.totalorder %v391, 2
        %vm393 = vcmp.eq.s32.totalorder %v391, 0
        %v394 = vxor.u32 %v388, 2147483648
        %v395 = vsel %vm393, %v387, %v394
        %vm396 = vcmp.eq.s32.totalorder %v391, 2
        %v397 = vxor.u32 %v387, 2147483648
        %v398 = vsel %vm396, %v397, %v388
        %v399 = vsel %vm392, %v395, %v398
        %v400 = vsel %vm389, nan, %v399
        %v401 = vand.u32 2147483647, %v187
        %vm402 = vcmp.le.f32.partialorder %v401, 0.7853982
        %vm403 = vcmp.lt.s32.totalorder %v187, 0
        %v404 = vand.u32 %v187, 2139095040
        %v405 = vshrl.u32 %v404, 23
        %v406 = vsub.s32 %v405, 127
        %v407 = vand.u32 2147483647, %v187
        %v408 = vand.u32 %v407, 8388607
        %v409 = vor.u32 %v408, 8388608
        %v410 = vsub.s32 0, %v409
        %v411 = vadd.s32 %v406, 1
        %vm412 = vcmp.gt.s32.totalorder %v411, 0
        %v413 = vsel %vm412, %v411, 0
        %v414 = vshrl.u32 %v413, 5
        %v415 = vand.u32 %v413, 31
        %v416 = vsub.s32 32, %v415
        %v417 = vshrl.u32 683565275, %v416
        %v418 = vshll.u32 683565275, %v415
        %v419 = vshrl.u32 2475754826, %v416
        %v420 = vor.u32 %v418, %v419
        %v421 = vshll.u32 2475754826, %v415
        %v422 = vshrl.u32 2131351028, %v416
        %v423 = vor.u32 %v421, %v422
        %v424 = vshll.u32 2131351028, %v415
        %v425 = vshrl.u32 2102212464, %v416
        %v426 = vor.u32 %v424, %v425
        %v427 = vshll.u32 2102212464, %v415
        %v428 = vshrl.u32 920167782, %v416
        %v429 = vor.u32 %v427, %v428
        %v430 = vshll.u32 920167782, %v415
        %v431 = vshrl.u32 1326507024, %v416
        %v432 = vor.u32 %v430, %v431
        %vm433 = vcmp.lt.s32.totalorder %v414, 1
        %vm434 = vcmp.lt.s32.totalorder %v414, 2
        %vm435 = vcmp.lt.s32.totalorder %v414, 3
        %vm436 = vcmp.lt.s32.totalorder %v414, 4
        %v437 = vsel %vm433, %v417, %v420
        %v438 = vsel %vm436, %v426, 2102212464
        %v439 = vsel %vm435, %v423, %v438
        %v440 = vsel %vm434, %v437, %v439
        %v441 = vsel %vm433, %v420, %v423
        %v442 = vsel %vm436, %v429, 920167782
        %v443 = vsel %vm435, %v426, %v442
        %v444 = vsel %vm434, %v441, %v443
        %v445 = vsel %vm433, %v423, %v426
        %v446 = vsel %vm436, %v432, 1326507024
        %v447 = vsel %vm435, %v429, %v446
        %v448 = vsel %vm434, %v445, %v447
        %v449 = vshll.u32 %v409, 8
        %v450 = vmul.u32.u64.compose %v449, %v448
        %v451 = vextract.low.u32 %v450
        %v452 = vextract.high.u32 %v450
        %v453 = vmul.u32.u64.compose %v449, %v444
        %v454 = vextract.low.u32 %v453
        %v455 = vextract.high.u32 %v453
        %v456 = vmul.u32 %v449, %v440
        %v457 = vadd.s32 %v452, %v454
        %vm458 = vc.u32 %v452, %v454
        %v459 = vadd.s32 %v455, 1
        %v460 = vsel %vm458, %v459, %v455
        %v461 = vadd.s32 %v456, %v460
        %v462 = vadd.s32 %v461, 536870912
        %v463 = vshrl.u32 %v462, 30
        %v464 = vshll.u32 %v463, 30
        %v465 = vsub.s32 %v461, %v464
        %vm466 = vcmp.lt.s32.totalorder %v465, 0
        %v467 = vsub.s32 0, %v465
        %v468 = vsel %vm466, %v467, %v465
        %v469 = vclz %v468
        %v470 = vsub.s32 %v469, 2
        %vm471 = vcmp.gt.s32.totalorder 0, %v470
        %v472 = vsel %vm471, 0, %v470
        %v473 = vsub.s32 32, %v472
        %v474 = vshll.u32 %v465, %v472
        %v475 = vshrl.u32 %v457, %v473
        %v476 = vor.u32 %v474, %v475
        %v477 = vsub.s32 4294967266, %v472
        %v478 = vadd.s32 %v477, 127
        %v479 = vshll.u32 %v478, 23
        %v480 = vor.u32 4788187, %v479
        %v481 = vand.u32 2147483647, %v480
        %v483 = vcvt.s32.f32 %v476
        %v484 = vmul.f32 %v483, %v481
        %v485 = vxor.u32 %v484, 2147483648
        %v486 = vsel %vm403, %v485, %v484
        %v487 = vsub.s32 4, %v463
        %v488 = vsel %vm403, %v487, %v463
        %v489 = vsel %vm402, %v187, %v486
        %v490 = vsel %vm402, 0, %v488
        %v491 = vcosq.f32.pop %v489
        %v492 = vsinq.f32.pop %v489
        %vm493 = vweird.f32 %v187
        %v494 = vadd.s32 %v490, 3
        %v495 = vand.u32 %v494, 3
        %vm496 = vcmp.lt.s32.totalorder %v495, 2
        %vm497 = vcmp.eq.s32.totalorder %v495, 0
        %v498 = vxor.u32 %v492, 2147483648
        %v499 = vsel %vm497, %v491, %v498
        %vm500 = vcmp.eq.s32.totalorder %v495, 2
        %v501 = vxor.u32 %v491, 2147483648
        %v502 = vsel %vm500, %v501, %v492
        %v503 = vsel %vm496, %v499, %v502
        %v504 = vsel %vm493, nan, %v503
        %v505 = vand.u32 2147483647, %v188
        %vm506 = vcmp.le.f32.partialorder %v505, 0.7853982
        %vm507 = vcmp.lt.s32.totalorder %v188, 0
        %v508 = vand.u32 %v188, 2139095040
        %v509 = vshrl.u32 %v508, 23
        %v510 = vsub.s32 %v509, 127
        %v511 = vand.u32 2147483647, %v188
        %v512 = vand.u32 %v511, 8388607
        %v513 = vor.u32 %v512, 8388608
        %v514 = vsub.s32 0, %v513
        %v515 = vadd.s32 %v510, 1
        %vm516 = vcmp.gt.s32.totalorder %v515, 0
        %v517 = vsel %vm516, %v515, 0
        %v518 = vshrl.u32 %v517, 5
        %v519 = vand.u32 %v517, 31
        %v520 = vsub.s32 32, %v519
        %v521 = vshrl.u32 683565275, %v520
        %v522 = vshll.u32 683565275, %v519
        %v523 = vshrl.u32 2475754826, %v520
        %v524 = vor.u32 %v522, %v523
        %v525 = vshll.u32 2475754826, %v519
        %v526 = vshrl.u32 2131351028, %v520
        %v527 = vor.u32 %v525, %v526
        %v528 = vshll.u32 2131351028, %v519
        %v529 = vshrl.u32 2102212464, %v520
        %v530 = vor.u32 %v528, %v529
        %v531 = vshll.u32 2102212464, %v519
        %v532 = vshrl.u32 920167782, %v520
        %v533 = vor.u32 %v531, %v532
        %v534 = vshll.u32 920167782, %v519
        %v535 = vshrl.u32 1326507024, %v520
        %v536 = vor.u32 %v534, %v535
        %vm537 = vcmp.lt.s32.totalorder %v518, 1
        %vm538 = vcmp.lt.s32.totalorder %v518, 2
        %vm539 = vcmp.lt.s32.totalorder %v518, 3
        %vm540 = vcmp.lt.s32.totalorder %v518, 4
        %v541 = vsel %vm537, %v521, %v524
        %v542 = vsel %vm540, %v530, 2102212464
        %v543 = vsel %vm539, %v527, %v542
        %v544 = vsel %vm538, %v541, %v543
        %v545 = vsel %vm537, %v524, %v527
        %v546 = vsel %vm540, %v533, 920167782
        %v547 = vsel %vm539, %v530, %v546
        %v548 = vsel %vm538, %v545, %v547
        %v549 = vsel %vm537, %v527, %v530
        %v550 = vsel %vm540, %v536, 1326507024
        %v551 = vsel %vm539, %v533, %v550
        %v552 = vsel %vm538, %v549, %v551
        %v553 = vshll.u32 %v513, 8
        %v554 = vmul.u32.u64.compose %v553, %v552
        %v555 = vextract.low.u32 %v554
        %v556 = vextract.high.u32 %v554
        %v557 = vmul.u32.u64.compose %v553, %v548
        %v558 = vextract.low.u32 %v557
        %v559 = vextract.high.u32 %v557
        %v560 = vmul.u32 %v553, %v544
        %v561 = vadd.s32 %v556, %v558
        %vm562 = vc.u32 %v556, %v558
        %v563 = vadd.s32 %v559, 1
        %v564 = vsel %vm562, %v563, %v559
        %v565 = vadd.s32 %v560, %v564
        %v566 = vadd.s32 %v565, 536870912
        %v567 = vshrl.u32 %v566, 30
        %v568 = vshll.u32 %v567, 30
        %v569 = vsub.s32 %v565, %v568
        %vm570 = vcmp.lt.s32.totalorder %v569, 0
        %v571 = vsub.s32 0, %v569
        %v572 = vsel %vm570, %v571, %v569
        %v573 = vclz %v572
        %v574 = vsub.s32 %v573, 2
        %vm575 = vcmp.gt.s32.totalorder 0, %v574
        %v576 = vsel %vm575, 0, %v574
        %v577 = vsub.s32 32, %v576
        %v578 = vshll.u32 %v569, %v576
        %v579 = vshrl.u32 %v561, %v577
        %v580 = vor.u32 %v578, %v579
        %v581 = vsub.s32 4294967266, %v576
        %v582 = vadd.s32 %v581, 127
        %v583 = vshll.u32 %v582, 23
        %v584 = vor.u32 4788187, %v583
        %v585 = vand.u32 2147483647, %v584
        %v587 = vcvt.s32.f32 %v580
        %v588 = vmul.f32 %v587, %v585
        %v589 = vxor.u32 %v588, 2147483648
        %v590 = vsel %vm507, %v589, %v588
        %v591 = vsub.s32 4, %v567
        %v592 = vsel %vm507, %v591, %v567
        %v593 = vsel %vm506, %v188, %v590
        %v594 = vsel %vm506, 0, %v592
        %v595 = vcosq.f32.pop %v593
        %v596 = vsinq.f32.pop %v593
        %vm597 = vweird.f32 %v188
        %v598 = vadd.s32 %v594, 3
        %v599 = vand.u32 %v598, 3
        %vm600 = vcmp.lt.s32.totalorder %v599, 2
        %vm601 = vcmp.eq.s32.totalorder %v599, 0
        %v602 = vxor.u32 %v596, 2147483648
        %v603 = vsel %vm601, %v595, %v602
        %vm604 = vcmp.eq.s32.totalorder %v599, 2
        %v605 = vxor.u32 %v595, 2147483648
        %v606 = vsel %vm604, %v605, %v596
        %v607 = vsel %vm600, %v603, %v606
        %v608 = vsel %vm597, nan, %v607
        %v609 = vand.u32 2147483647, %v189
        %vm610 = vcmp.le.f32.partialorder %v609, 0.7853982
        %vm611 = vcmp.lt.s32.totalorder %v189, 0
        %v612 = vand.u32 %v189, 2139095040
        %v613 = vshrl.u32 %v612, 23
        %v614 = vsub.s32 %v613, 127
        %v615 = vand.u32 2147483647, %v189
        %v616 = vand.u32 %v615, 8388607
        %v617 = vor.u32 %v616, 8388608
        %v618 = vsub.s32 0, %v617
        %v619 = vadd.s32 %v614, 1
        %vm620 = vcmp.gt.s32.totalorder %v619, 0
        %v621 = vsel %vm620, %v619, 0
        %v622 = vshrl.u32 %v621, 5
        %v623 = vand.u32 %v621, 31
        %v624 = vsub.s32 32, %v623
        %v625 = vshrl.u32 683565275, %v624
        %v626 = vshll.u32 683565275, %v623
        %v627 = vshrl.u32 2475754826, %v624
        %v628 = vor.u32 %v626, %v627
        %v629 = vshll.u32 2475754826, %v623
        %v630 = vshrl.u32 2131351028, %v624
        %v631 = vor.u32 %v629, %v630
        %v632 = vshll.u32 2131351028, %v623
        %v633 = vshrl.u32 2102212464, %v624
        %v634 = vor.u32 %v632, %v633
        %v635 = vshll.u32 2102212464, %v623
        %v636 = vshrl.u32 920167782, %v624
        %v637 = vor.u32 %v635, %v636
        %v638 = vshll.u32 920167782, %v623
        %v639 = vshrl.u32 1326507024, %v624
        %v640 = vor.u32 %v638, %v639
        %vm641 = vcmp.lt.s32.totalorder %v622, 1
        %vm642 = vcmp.lt.s32.totalorder %v622, 2
        %vm643 = vcmp.lt.s32.totalorder %v622, 3
        %vm644 = vcmp.lt.s32.totalorder %v622, 4
        %v645 = vsel %vm641, %v625, %v628
        %v646 = vsel %vm644, %v634, 2102212464
        %v647 = vsel %vm643, %v631, %v646
        %v648 = vsel %vm642, %v645, %v647
        %v649 = vsel %vm641, %v628, %v631
        %v650 = vsel %vm644, %v637, 920167782
        %v651 = vsel %vm643, %v634, %v650
        %v652 = vsel %vm642, %v649, %v651
        %v653 = vsel %vm641, %v631, %v634
        %v654 = vsel %vm644, %v640, 1326507024
        %v655 = vsel %vm643, %v637, %v654
        %v656 = vsel %vm642, %v653, %v655
        %v657 = vshll.u32 %v617, 8
        %v658 = vmul.u32.u64.compose %v657, %v656
        %v659 = vextract.low.u32 %v658
        %v660 = vextract.high.u32 %v658
        %v661 = vmul.u32.u64.compose %v657, %v652
        %v662 = vextract.low.u32 %v661
        %v663 = vextract.high.u32 %v661
        %v664 = vmul.u32 %v657, %v648
        %v665 = vadd.s32 %v660, %v662
        %vm666 = vc.u32 %v660, %v662
        %v667 = vadd.s32 %v663, 1
        %v668 = vsel %vm666, %v667, %v663
        %v669 = vadd.s32 %v664, %v668
        %v670 = vadd.s32 %v669, 536870912
        %v671 = vshrl.u32 %v670, 30
        %v672 = vshll.u32 %v671, 30
        %v673 = vsub.s32 %v669, %v672
        %vm674 = vcmp.lt.s32.totalorder %v673, 0
        %v675 = vsub.s32 0, %v673
        %v676 = vsel %vm674, %v675, %v673
        %v677 = vclz %v676
        %v678 = vsub.s32 %v677, 2
        %vm679 = vcmp.gt.s32.totalorder 0, %v678
        %v680 = vsel %vm679, 0, %v678
        %v681 = vsub.s32 32, %v680
        %v682 = vshll.u32 %v673, %v680
        %v683 = vshrl.u32 %v665, %v681
        %v684 = vor.u32 %v682, %v683
        %v685 = vsub.s32 4294967266, %v680
        %v686 = vadd.s32 %v685, 127
        %v687 = vshll.u32 %v686, 23
        %v688 = vor.u32 4788187, %v687
        %v689 = vand.u32 2147483647, %v688
        %v691 = vcvt.s32.f32 %v684
        %v692 = vmul.f32 %v691, %v689
        %v693 = vxor.u32 %v692, 2147483648
        %v694 = vsel %vm611, %v693, %v692
        %v695 = vsub.s32 4, %v671
        %v696 = vsel %vm611, %v695, %v671
        %v697 = vsel %vm610, %v189, %v694
        %v698 = vsel %vm610, 0, %v696
        %v699 = vcosq.f32.pop %v697
        %v700 = vsinq.f32.pop %v697
        %vm701 = vweird.f32 %v189
        %v702 = vadd.s32 %v698, 3
        %v703 = vand.u32 %v702, 3
        %vm704 = vcmp.lt.s32.totalorder %v703, 2
        %vm705 = vcmp.eq.s32.totalorder %v703, 0
        %v706 = vxor.u32 %v700, 2147483648
        %v707 = vsel %vm705, %v699, %v706
        %vm708 = vcmp.eq.s32.totalorder %v703, 2
        %v709 = vxor.u32 %v699, 2147483648
        %v710 = vsel %vm708, %v709, %v700
        %v711 = vsel %vm704, %v707, %v710
        %v712 = vsel %vm701, nan, %v711
        %v713 = vand.u32 2147483647, %v190
        %vm714 = vcmp.le.f32.partialorder %v713, 0.7853982
        %vm715 = vcmp.lt.s32.totalorder %v190, 0
        %v716 = vand.u32 %v190, 2139095040
        %v717 = vshrl.u32 %v716, 23
        %v718 = vsub.s32 %v717, 127
        %v719 = vand.u32 2147483647, %v190
        %v720 = vand.u32 %v719, 8388607
        %v721 = vor.u32 %v720, 8388608
        %v722 = vsub.s32 0, %v721
        %v723 = vadd.s32 %v718, 1
        %vm724 = vcmp.gt.s32.totalorder %v723, 0
        %v725 = vsel %vm724, %v723, 0
        %v726 = vshrl.u32 %v725, 5
        %v727 = vand.u32 %v725, 31
        %v728 = vsub.s32 32, %v727
        %v729 = vshrl.u32 683565275, %v728
        %v730 = vshll.u32 683565275, %v727
        %v731 = vshrl.u32 2475754826, %v728
        %v732 = vor.u32 %v730, %v731
        %v733 = vshll.u32 2475754826, %v727
        %v734 = vshrl.u32 2131351028, %v728
        %v735 = vor.u32 %v733, %v734
        %v736 = vshll.u32 2131351028, %v727
        %v737 = vshrl.u32 2102212464, %v728
        %v738 = vor.u32 %v736, %v737
        %v739 = vshll.u32 2102212464, %v727
        %v740 = vshrl.u32 920167782, %v728
        %v741 = vor.u32 %v739, %v740
        %v742 = vshll.u32 920167782, %v727
        %v743 = vshrl.u32 1326507024, %v728
        %v744 = vor.u32 %v742, %v743
        %vm745 = vcmp.lt.s32.totalorder %v726, 1
        %vm746 = vcmp.lt.s32.totalorder %v726, 2
        %vm747 = vcmp.lt.s32.totalorder %v726, 3
        %vm748 = vcmp.lt.s32.totalorder %v726, 4
        %v749 = vsel %vm745, %v729, %v732
        %v750 = vsel %vm748, %v738, 2102212464
        %v751 = vsel %vm747, %v735, %v750
        %v752 = vsel %vm746, %v749, %v751
        %v753 = vsel %vm745, %v732, %v735
        %v754 = vsel %vm748, %v741, 920167782
        %v755 = vsel %vm747, %v738, %v754
        %v756 = vsel %vm746, %v753, %v755
        %v757 = vsel %vm745, %v735, %v738
        %v758 = vsel %vm748, %v744, 1326507024
        %v759 = vsel %vm747, %v741, %v758
        %v760 = vsel %vm746, %v757, %v759
        %v761 = vshll.u32 %v721, 8
        %v762 = vmul.u32.u64.compose %v761, %v760
        %v763 = vextract.low.u32 %v762
        %v764 = vextract.high.u32 %v762
        %v765 = vmul.u32.u64.compose %v761, %v756
        %v766 = vextract.low.u32 %v765
        %v767 = vextract.high.u32 %v765
        %v768 = vmul.u32 %v761, %v752
        %v769 = vadd.s32 %v764, %v766
        %vm770 = vc.u32 %v764, %v766
        %v771 = vadd.s32 %v767, 1
        %v772 = vsel %vm770, %v771, %v767
        %v773 = vadd.s32 %v768, %v772
        %v774 = vadd.s32 %v773, 536870912
        %v775 = vshrl.u32 %v774, 30
        %v776 = vshll.u32 %v775, 30
        %v777 = vsub.s32 %v773, %v776
        %vm778 = vcmp.lt.s32.totalorder %v777, 0
        %v779 = vsub.s32 0, %v777
        %v780 = vsel %vm778, %v779, %v777
        %v781 = vclz %v780
        %v782 = vsub.s32 %v781, 2
        %vm783 = vcmp.gt.s32.totalorder 0, %v782
        %v784 = vsel %vm783, 0, %v782
        %v785 = vsub.s32 32, %v784
        %v786 = vshll.u32 %v777, %v784
        %v787 = vshrl.u32 %v769, %v785
        %v788 = vor.u32 %v786, %v787
        %v789 = vsub.s32 4294967266, %v784
        %v790 = vadd.s32 %v789, 127
        %v791 = vshll.u32 %v790, 23
        %v792 = vor.u32 4788187, %v791
        %v793 = vand.u32 2147483647, %v792
        %v795 = vcvt.s32.f32 %v788
        %v796 = vmul.f32 %v795, %v793
        %v797 = vxor.u32 %v796, 2147483648
        %v798 = vsel %vm715, %v797, %v796
        %v799 = vsub.s32 4, %v775
        %v800 = vsel %vm715, %v799, %v775
        %v801 = vsel %vm714, %v190, %v798
        %v802 = vsel %vm714, 0, %v800
        %v803 = vcosq.f32.pop %v801
        %v804 = vsinq.f32.pop %v801
        %vm805 = vweird.f32 %v190
        %v806 = vadd.s32 %v802, 3
        %v807 = vand.u32 %v806, 3
        %vm808 = vcmp.lt.s32.totalorder %v807, 2
        %vm809 = vcmp.eq.s32.totalorder %v807, 0
        %v810 = vxor.u32 %v804, 2147483648
        %v811 = vsel %vm809, %v803, %v810
        %vm812 = vcmp.eq.s32.totalorder %v807, 2
        %v813 = vxor.u32 %v803, 2147483648
        %v814 = vsel %vm812, %v813, %v804
        %v815 = vsel %vm808, %v811, %v814
        %v816 = vsel %vm805, nan, %v815
        %v817 = vand.u32 2147483647, %v191
        %vm818 = vcmp.le.f32.partialorder %v817, 0.7853982
        %vm819 = vcmp.lt.s32.totalorder %v191, 0
        %v820 = vand.u32 %v191, 2139095040
        %v821 = vshrl.u32 %v820, 23
        %v822 = vsub.s32 %v821, 127
        %v823 = vand.u32 2147483647, %v191
        %v824 = vand.u32 %v823, 8388607
        %v825 = vor.u32 %v824, 8388608
        %v826 = vsub.s32 0, %v825
        %v827 = vadd.s32 %v822, 1
        %vm828 = vcmp.gt.s32.totalorder %v827, 0
        %v829 = vsel %vm828, %v827, 0
        %v830 = vshrl.u32 %v829, 5
        %v831 = vand.u32 %v829, 31
        %v832 = vsub.s32 32, %v831
        %v833 = vshrl.u32 683565275, %v832
        %v834 = vshll.u32 683565275, %v831
        %v835 = vshrl.u32 2475754826, %v832
        %v836 = vor.u32 %v834, %v835
        %v837 = vshll.u32 2475754826, %v831
        %v838 = vshrl.u32 2131351028, %v832
        %v839 = vor.u32 %v837, %v838
        %v840 = vshll.u32 2131351028, %v831
        %v841 = vshrl.u32 2102212464, %v832
        %v842 = vor.u32 %v840, %v841
        %v843 = vshll.u32 2102212464, %v831
        %v844 = vshrl.u32 920167782, %v832
        %v845 = vor.u32 %v843, %v844
        %v846 = vshll.u32 920167782, %v831
        %v847 = vshrl.u32 1326507024, %v832
        %v848 = vor.u32 %v846, %v847
        %vm849 = vcmp.lt.s32.totalorder %v830, 1
        %vm850 = vcmp.lt.s32.totalorder %v830, 2
        %vm851 = vcmp.lt.s32.totalorder %v830, 3
        %vm852 = vcmp.lt.s32.totalorder %v830, 4
        %v853 = vsel %vm849, %v833, %v836
        %v854 = vsel %vm852, %v842, 2102212464
        %v855 = vsel %vm851, %v839, %v854
        %v856 = vsel %vm850, %v853, %v855
        %v857 = vsel %vm849, %v836, %v839
        %v858 = vsel %vm852, %v845, 920167782
        %v859 = vsel %vm851, %v842, %v858
        %v860 = vsel %vm850, %v857, %v859
        %v861 = vsel %vm849, %v839, %v842
        %v862 = vsel %vm852, %v848, 1326507024
        %v863 = vsel %vm851, %v845, %v862
        %v864 = vsel %vm850, %v861, %v863
        %v865 = vshll.u32 %v825, 8
        %v866 = vmul.u32.u64.compose %v865, %v864
        %v867 = vextract.low.u32 %v866
        %v868 = vextract.high.u32 %v866
        %v869 = vmul.u32.u64.compose %v865, %v860
        %v870 = vextract.low.u32 %v869
        %v871 = vextract.high.u32 %v869
        %v872 = vmul.u32 %v865, %v856
        %v873 = vadd.s32 %v868, %v870
        %vm874 = vc.u32 %v868, %v870
        %v875 = vadd.s32 %v871, 1
        %v876 = vsel %vm874, %v875, %v871
        %v877 = vadd.s32 %v872, %v876
        %v878 = vadd.s32 %v877, 536870912
        %v879 = vshrl.u32 %v878, 30
        %v880 = vshll.u32 %v879, 30
        %v881 = vsub.s32 %v877, %v880
        %vm882 = vcmp.lt.s32.totalorder %v881, 0
        %v883 = vsub.s32 0, %v881
        %v884 = vsel %vm882, %v883, %v881
        %v885 = vclz %v884
        %v886 = vsub.s32 %v885, 2
        %vm887 = vcmp.gt.s32.totalorder 0, %v886
        %v888 = vsel %vm887, 0, %v886
        %v889 = vsub.s32 32, %v888
        %v890 = vshll.u32 %v881, %v888
        %v891 = vshrl.u32 %v873, %v889
        %v892 = vor.u32 %v890, %v891
        %v893 = vsub.s32 4294967266, %v888
        %v894 = vadd.s32 %v893, 127
        %v895 = vshll.u32 %v894, 23
        %v896 = vor.u32 4788187, %v895
        %v897 = vand.u32 2147483647, %v896
        %v899 = vcvt.s32.f32 %v892
        %v900 = vmul.f32 %v899, %v897
        %v901 = vxor.u32 %v900, 2147483648
        %v902 = vsel %vm819, %v901, %v900
        %v903 = vsub.s32 4, %v879
        %v904 = vsel %vm819, %v903, %v879
        %v905 = vsel %vm818, %v191, %v902
        %v906 = vsel %vm818, 0, %v904
        %v907 = vcosq.f32.pop %v905
        %v908 = vsinq.f32.pop %v905
        %vm909 = vweird.f32 %v191
        %v910 = vadd.s32 %v906, 3
        %v911 = vand.u32 %v910, 3
        %vm912 = vcmp.lt.s32.totalorder %v911, 2
        %vm913 = vcmp.eq.s32.totalorder %v911, 0
        %v914 = vxor.u32 %v908, 2147483648
        %v915 = vsel %vm913, %v907, %v914
        %vm916 = vcmp.eq.s32.totalorder %v911, 2
        %v917 = vxor.u32 %v907, 2147483648
        %v918 = vsel %vm916, %v917, %v908
        %v919 = vsel %vm912, %v915, %v918
        %v920 = vsel %vm909, nan, %v919
        %v921 = vand.u32 2147483647, %v192
        %vm922 = vcmp.le.f32.partialorder %v921, 0.7853982
        %vm923 = vcmp.lt.s32.totalorder %v192, 0
        %v924 = vand.u32 %v192, 2139095040
        %v925 = vshrl.u32 %v924, 23
        %v926 = vsub.s32 %v925, 127
        %v927 = vand.u32 2147483647, %v192
        %v928 = vand.u32 %v927, 8388607
        %v929 = vor.u32 %v928, 8388608
        %v930 = vsub.s32 0, %v929
        %v931 = vadd.s32 %v926, 1
        %vm932 = vcmp.gt.s32.totalorder %v931, 0
        %v933 = vsel %vm932, %v931, 0
        %v934 = vshrl.u32 %v933, 5
        %v935 = vand.u32 %v933, 31
        %v936 = vsub.s32 32, %v935
        %v937 = vshrl.u32 683565275, %v936
        %v938 = vshll.u32 683565275, %v935
        %v939 = vshrl.u32 2475754826, %v936
        %v940 = vor.u32 %v938, %v939
        %v941 = vshll.u32 2475754826, %v935
        %v942 = vshrl.u32 2131351028, %v936
        %v943 = vor.u32 %v941, %v942
        %v944 = vshll.u32 2131351028, %v935
        %v945 = vshrl.u32 2102212464, %v936
        %v946 = vor.u32 %v944, %v945
        %v947 = vshll.u32 2102212464, %v935
        %v948 = vshrl.u32 920167782, %v936
        %v949 = vor.u32 %v947, %v948
        %v950 = vshll.u32 920167782, %v935
        %v951 = vshrl.u32 1326507024, %v936
        %v952 = vor.u32 %v950, %v951
        %vm953 = vcmp.lt.s32.totalorder %v934, 1
        %vm954 = vcmp.lt.s32.totalorder %v934, 2
        %vm955 = vcmp.lt.s32.totalorder %v934, 3
        %vm956 = vcmp.lt.s32.totalorder %v934, 4
        %v957 = vsel %vm953, %v937, %v940
        %v958 = vsel %vm956, %v946, 2102212464
        %v959 = vsel %vm955, %v943, %v958
        %v960 = vsel %vm954, %v957, %v959
        %v961 = vsel %vm953, %v940, %v943
        %v962 = vsel %vm956, %v949, 920167782
        %v963 = vsel %vm955, %v946, %v962
        %v964 = vsel %vm954, %v961, %v963
        %v965 = vsel %vm953, %v943, %v946
        %v966 = vsel %vm956, %v952, 1326507024
        %v967 = vsel %vm955, %v949, %v966
        %v968 = vsel %vm954, %v965, %v967
        %v969 = vshll.u32 %v929, 8
        %v970 = vmul.u32.u64.compose %v969, %v968
        %v971 = vextract.low.u32 %v970
        %v972 = vextract.high.u32 %v970
        %v973 = vmul.u32.u64.compose %v969, %v964
        %v974 = vextract.low.u32 %v973
        %v975 = vextract.high.u32 %v973
        %v976 = vmul.u32 %v969, %v960
        %v977 = vadd.s32 %v972, %v974
        %vm978 = vc.u32 %v972, %v974
        %v979 = vadd.s32 %v975, 1
        %v980 = vsel %vm978, %v979, %v975
        %v981 = vadd.s32 %v976, %v980
        %v982 = vadd.s32 %v981, 536870912
        %v983 = vshrl.u32 %v982, 30
        %v984 = vshll.u32 %v983, 30
        %v985 = vsub.s32 %v981, %v984
        %vm986 = vcmp.lt.s32.totalorder %v985, 0
        %v987 = vsub.s32 0, %v985
        %v988 = vsel %vm986, %v987, %v985
        %v989 = vclz %v988
        %v990 = vsub.s32 %v989, 2
        %vm991 = vcmp.gt.s32.totalorder 0, %v990
        %v992 = vsel %vm991, 0, %v990
        %v993 = vsub.s32 32, %v992
        %v994 = vshll.u32 %v985, %v992
        %v995 = vshrl.u32 %v977, %v993
        %v996 = vor.u32 %v994, %v995
        %v997 = vsub.s32 4294967266, %v992
        %v998 = vadd.s32 %v997, 127
        %v999 = vshll.u32 %v998, 23
        %v1000 = vor.u32 4788187, %v999
        %v1001 = vand.u32 2147483647, %v1000
        %v1003 = vcvt.s32.f32 %v996
        %v1004 = vmul.f32 %v1003, %v1001
        %v1005 = vxor.u32 %v1004, 2147483648
        %v1006 = vsel %vm923, %v1005, %v1004
        %v1007 = vsub.s32 4, %v983
        %v1008 = vsel %vm923, %v1007, %v983
        %v1009 = vsel %vm922, %v192, %v1006
        %v1010 = vsel %vm922, 0, %v1008
        %v1011 = vcosq.f32.pop %v1009
        %v1012 = vsinq.f32.pop %v1009
        %vm1013 = vweird.f32 %v192
        %v1014 = vadd.s32 %v1010, 3
        %v1015 = vand.u32 %v1014, 3
        %vm1016 = vcmp.lt.s32.totalorder %v1015, 2
        %vm1017 = vcmp.eq.s32.totalorder %v1015, 0
        %v1018 = vxor.u32 %v1012, 2147483648
        %v1019 = vsel %vm1017, %v1011, %v1018
        %vm1020 = vcmp.eq.s32.totalorder %v1015, 2
        %v1021 = vxor.u32 %v1011, 2147483648
        %v1022 = vsel %vm1020, %v1021, %v1012
        %v1023 = vsel %vm1016, %v1019, %v1022
        %v1024 = vsel %vm1013, nan, %v1023
        %1025 = vst [vmem:[%s134] sm:$0xff] %v296
        %1026 = vst [vmem:[%s134 + $0x8] sm:$0xff] %v400
        %1027 = vst [vmem:[%s134 + $0x10] sm:$0xff] %v504
        %1028 = vst [vmem:[%s134 + $0x18] sm:$0xff] %v608
        %1029 = vst [vmem:[%s134 + $0x20] sm:$0xff] %v712
        %1030 = vst [vmem:[%s134 + $0x28] sm:$0xff] %v816
        %1031 = vst [vmem:[%s134 + $0x30] sm:$0xff] %v920
        %1032 = vst [vmem:[%s134 + $0x38] sm:$0xff] %v1024
        %s1033 = sand.u32 %s67, 1
        %s1034 = scalar_lea.sflag [#allocation4], %s1033
        %s1035 = sand.u32 %s67, 1
        %s1036 = smul.addr %s1035, 64
        %s1037 = scalar_lea.vmem [#allocation5], %s1036
        // Predicated region
        $region33: #{tpu_custom_call.1} parent=27 // pred_check
          %p1038 = pneg %p77
        $region34: #{tpu_custom_call.1} parent=27 // pred_check_branch
          %1040 = sbr.rel (%p1038) target = $region36
        $region35: #{tpu_custom_call.1} parent=27 // pred_region
          %s1041 = smul.u32 8, %s17
          %s1043 = ssub.s32 1024, 1024
          %1044 = vsyncadd %s1034, %s1043
          %s1045 = smul.addr %s1041, 128
          %s1046 = scalar_lea.hbm %s2, %s1045
          %s1047 = sshll.u32 %s1037, 4
          %s1048 = int_to_ptr.vmem [resolvable:$true] %s1047
          %1053 = dma.vmem_to_hbm [thread:$0]  %s1048, 1024, %s1046, %s1034, 128, 128, 8
        $region36: #{tpu_custom_call.1} parent=27 // pred_fallthru
          _
      $region28: #{tpu_custom_call.1} parent=5 // pred_fallthru
        _
      %p1054 = scmp.le.s32.totalorder 2, %s12
      // Predicated region
      $region37: #{tpu_custom_call.1} parent=5 // pred_check
        %p1055 = pneg %p1054
      $region38: #{tpu_custom_call.1} parent=5 // pred_check_branch
        %1057 = sbr.rel (%p1055) target = $region40
      $region39: #{tpu_custom_call.1} parent=5 // pred_region
        %s1058 = ssub.s32 %s12, 2
        // Predicated region
        $region41: #{tpu_custom_call.1} parent=39 // pred_check
          %p1059 = pneg %p83
        $region42: #{tpu_custom_call.1} parent=39 // pred_check_branch
          %1061 = sbr.rel (%p1059) target = $region44
        $region43: #{tpu_custom_call.1} parent=39 // pred_region
          %s1062 = sand.u32 %s68, 1
          %s1063 = scalar_lea.sflag [#allocation4], %s1062
          %s1064 = sand.u32 %s68, 1
          %s1065 = smul.addr %s1064, 64
          %s1066 = scalar_lea.vmem [#allocation5], %s1065
          %1067 = dma.done %s1063, 1024
        $region44: #{tpu_custom_call.1} parent=39 // pred_fallthru
          _
      $region40: #{tpu_custom_call.1} parent=5 // pred_fallthru
        _
    $region6: #{tpu_custom_call.1} parent=1 // loop_footer
      %s16 = sadd.s32 1, %s12
    $region7: #{tpu_custom_call.1} parent=1 // loop_footer_branch
      %11 = sbr.rel target = $region3
    $region8: #{tpu_custom_call.1} parent=1 // loop_exit
      _
    %1068 = vsyncpa [#allocation3], 1
    %s1069 = scalar_lea.sflag [#allocation3], 1
    %1070 = vsyncpa %s1069, 1
    %1071 = vsyncpa [#allocation4], 1
    %s1072 = scalar_lea.sflag [#allocation4], 1
    %1073 = vsyncpa %s1072, 1

</llo_original>
